<compile_context>
chip_gen: v6e
topology: v6e:2x2x1
jax: 0.10.0
libtpu: 0.0.40
codegen_flags: <defaults>
</compile_context>

<pallas_src>
import math

import jax
import jax.numpy as jnp
from jax.experimental import pallas as pl
from jax.experimental.pallas import tpu as pltpu


def _to_2tuple(v):
    if isinstance(v, (tuple, list)):
        assert len(v) == 2
        return tuple(v)
    return (v, v)


def _get_pad_shape(input_hw, kernel_size, stride, dilation):
    """Same math as AdaptivePadding.get_pad_shape (static, shape-only)."""
    input_h, input_w = input_hw
    kernel_h, kernel_w = kernel_size
    stride_h, stride_w = stride
    dil_h, dil_w = dilation
    output_h = math.ceil(input_h / stride_h)
    output_w = math.ceil(input_w / stride_w)
    pad_h = max((output_h - 1) * stride_h + (kernel_h - 1) * dil_h + 1 - input_h, 0)
    pad_w = max((output_w - 1) * stride_w + (kernel_w - 1) * dil_w + 1 - input_w, 0)
    return pad_h, pad_w


def _round_up(a, b):
    return -(-a // b) * b


def _physical_vmem_bytes():
    """Per-core VMEM capacity; conservative fallback if the query is unavailable."""
    try:
        return int(pltpu.get_tpu_info().vmem_capacity_bytes)
    except Exception:
        return 64 * 1024 * 1024  # v7x per-TensorCore VMEM (smallest of the gens)


def _num_tensorcores_per_device():
    """Best-effort TensorCore count of the local device (v7x/megacore -> 2)."""
    try:
        d = jax.devices()[0]
        for attr in ("num_cores", "core_count", "num_cores_per_chip"):
            v = getattr(d, attr, None)
            if isinstance(v, int) and v > 0:
                return v
        kind = str(getattr(d, "device_kind", "")).lower()
        if any(t in kind for t in ("v7", "v4", "v3")):
            return 2
    except Exception:
        pass
    return 1


def _choose_num_steps(nc, max_tile, cores):
    """Pick grid length: big blocks, balanced across cores, divides NC if cheap."""
    s = -(-nc // max_tile)
    if cores > 1 and nc >= cores:
        s = max(s, cores)
        s = -(-s // cores) * cores  # multiple of the core count (balanced split)
    s = min(s, nc)
    # Prefer a step count that divides NC (uniform blocks) within a small window.
    hi = min(nc, 2 * s)
    for cand in range(s, hi + 1):
        if nc % cand == 0 and (cores <= 1 or nc < cores or cand % cores == 0):
            return cand
    return s


def _make_pad_kernel(H, W, Hp, Wp, p_top, p_bot, p_left, p_right, dtype):
    def pad_kernel(x_ref, o_ref):
        t = x_ref.shape[0]
        v = x_ref[...]
        # Build the padded tile in registers, then store the full block once at
        # offset 0 (aligned, unmasked stores; no misaligned interior slab).
        if p_left or p_right:
            parts = []
            if p_left:
                parts.append(jnp.zeros((t, H, p_left), dtype))
            parts.append(v)
            if p_right:
                parts.append(jnp.zeros((t, H, p_right), dtype))
            v = jnp.concatenate(parts, axis=2)
        if p_top or p_bot:
            parts = []
            if p_top:
                parts.append(jnp.zeros((t, p_top, Wp), dtype))
            parts.append(v)
            if p_bot:
                parts.append(jnp.zeros((t, p_bot, Wp), dtype))
            v = jnp.concatenate(parts, axis=1)
        o_ref[...] = v

    return pad_kernel


def adaptive_padding(x, kernel_size=1, stride=1, dilation=1, padding="corner"):
    """Pallas implementation of AdaptivePadding.forward.

    Args:
      x: jnp.ndarray of shape (N, C, H, W)  # NCHW, same as PyTorch
    Returns:
      Padded array of shape (N, C, H + pad_h, W + pad_w) (or x unchanged if no pad).
    """
    assert padding in ("same", "corner")
    kernel_size = _to_2tuple(kernel_size)
    stride = _to_2tuple(stride)
    dilation = _to_2tuple(dilation)

    N, C, H, W = x.shape
    pad_h, pad_w = _get_pad_shape((H, W), kernel_size, stride, dilation)
    if pad_h == 0 and pad_w == 0:
        return x

    if padding == "corner":
        pad_top, pad_left = 0, 0
    else:  # 'same'
        pad_top, pad_left = pad_h // 2, pad_w // 2
    pad_bottom = pad_h - pad_top
    pad_right = pad_w - pad_left

    Hp, Wp = H + pad_h, W + pad_w
    NC = N * C
    dtype = x.dtype
    x_flat = x.reshape(NC, H, W)  # collapse batch+channel into one blockable axis

    # ---- Physical (lane/sublane-padded) VMEM footprint of one (n, c) slab ------
    itemsize = jnp.dtype(dtype).itemsize
    sublane = max(8, 32 // itemsize)  # 8 (f32) / 16 (bf16) / 32 (int8)
    lane = 128
    in_plane = _round_up(H, sublane) * _round_up(W, lane) * itemsize
    out_plane = _round_up(Hp, sublane) * _round_up(Wp, lane) * itemsize
    slab_phys = in_plane + out_plane

    phys_vmem = _physical_vmem_bytes()
    block_budget = (phys_vmem * 5) // 8  # double-buffered in+out blocks get ~62.5%

    max_tile = block_budget // (2 * slab_phys)  # x2 for double buffering
    if max_tile < 1:
        # A single (n, c) slab exceeds the VMEM budget (huge spatial planes).
        # TODO(synk): add an H-blocked Pallas path (second grid axis over rows,
        # pl.when-gated top/bottom border writes) instead of falling back to XLA.
        pads = ((0, 0), (0, 0), (pad_top, pad_bottom), (pad_left, pad_right))
        return jnp.pad(x, pads)

    cores = _num_tensorcores_per_device()
    steps = _choose_num_steps(NC, max_tile, cores)
    tile_nc = -(-NC // steps)            # ragged last block (if any) handled by Pallas
    steps = -(-NC // tile_nc)

    needed = 2 * tile_nc * slab_phys + 4 * 1024 * 1024
    vmem_limit = int(min((phys_vmem * 3) // 4, max(needed, 16 * 1024 * 1024)))

    kernel = _make_pad_kernel(H, W, Hp, Wp, pad_top, pad_bottom, pad_left, pad_right,
                              dtype)

    out_flat = pl.pallas_call(
        kernel,
        out_shape=jax.ShapeDtypeStruct((NC, Hp, Wp), dtype),
        grid=(steps,),
        in_specs=[pl.BlockSpec((tile_nc, H, W), lambda i: (i, 0, 0))],
        out_specs=pl.BlockSpec((tile_nc, Hp, Wp), lambda i: (i, 0, 0)),
        compiler_params=pltpu.CompilerParams(
            dimension_semantics=("parallel",),
            vmem_limit_bytes=vmem_limit,
        ),
    )(x_flat)

    # TODO(synk): the strategic win is fusing this pad into the downstream
    # patch-embed conv/matmul kernel so the padded tensor never round-trips HBM.
    return out_flat.reshape(N, C, Hp, Wp)


def _reference(x, kernel_size, stride, dilation, padding):
    """Pure-JAX reference matching F.pad semantics of the PyTorch module."""
    kernel_size = _to_2tuple(kernel_size)
    stride = _to_2tuple(stride)
    dilation = _to_2tuple(dilation)
    N, C, H, W = x.shape
    pad_h, pad_w = _get_pad_shape((H, W), kernel_size, stride, dilation)
    if pad_h == 0 and pad_w == 0:
        return x
    if padding == "corner":
        pads = ((0, 0), (0, 0), (0, pad_h), (0, pad_w))
    else:
        pads = ((0, 0), (0, 0),
                (pad_h // 2, pad_h - pad_h // 2),
                (pad_w // 2, pad_w - pad_w // 2))
    return jnp.pad(x, pads)


if __name__ == "__main__":
    key = jax.random.PRNGKey(0)
    # Small NCHW input: kernel_size=3, stride=2 on 16x16 => pad_h = pad_w = 1.
    x = jax.random.normal(key, (2, 4, 16, 16), dtype=jnp.float32)

    ok = True
    for mode in ("corner", "same"):
        out = jax.block_until_ready(
            adaptive_padding(x, kernel_size=3, stride=2, dilation=1, padding=mode))
        ref = _reference(x, kernel_size=3, stride=2, dilation=1, padding=mode)
        ok = ok and (out.shape == ref.shape) and bool(jnp.allclose(out, ref))

    # 'same' with asymmetric padding on both sides: kernel 7, stride 4 on 18x18
    # => pad_h = pad_w = 5 (2 top/left, 3 bottom/right).
    x2 = jax.random.normal(jax.random.PRNGKey(0), (2, 3, 18, 18), dtype=jnp.float32)
    out2 = jax.block_until_ready(
        adaptive_padding(x2, kernel_size=7, stride=4, dilation=1, padding="same"))
    ref2 = _reference(x2, kernel_size=7, stride=4, dilation=1, padding="same")
    ok = ok and (out2.shape == ref2.shape) and bool(jnp.allclose(out2, ref2))

    # No-pad path (kernel_size=1, stride=1) returns input unchanged.
    out_nopad = jax.block_until_ready(
        adaptive_padding(x, kernel_size=1, stride=1, dilation=1, padding="corner"))
    ok = ok and bool(jnp.allclose(out_nopad, x))

    if ok:
        print("KERNEL_OK")
    else:
        raise SystemExit("mismatch vs reference")
</pallas_src>

<mosaic_0001>
module attributes {stable_mosaic.version = 11 : i64} {
  func.func @pad_kernel(%arg0: i32, %arg1: memref<8x16x16xf32, #tpu.memory_space<vmem>>, %arg2: memref<8x17x17xf32, #tpu.memory_space<vmem>>) attributes {dimension_semantics = [#tpu.dimension_semantics<parallel>], iteration_bounds = array<i64: 1>, scalar_prefetch = 0 : i64, scratch_operands = 0 : i64, tpu.core_type = #tpu.core_type<tc>, window_params = [{transform_indices = @transform_0, window_bounds = array<i64: 8, 16, 16>}, {transform_indices = @transform_1, window_bounds = array<i64: 8, 17, 17>}]} {
    %c0 = arith.constant 0 : index
    %c0_0 = arith.constant 0 : index
    %c0_1 = arith.constant 0 : index
    %0 = vector.load %arg1[%c0, %c0_0, %c0_1] : memref<8x16x16xf32, #tpu.memory_space<vmem>>, vector<8x16x16xf32>
    %cst = arith.constant 0.000000e+00 : f32
    %1 = vector.broadcast %cst : f32 to vector<8x16x1xf32>
    %2 = tpu.concatenate %0, %1 in 2 : vector<8x16x16xf32>, vector<8x16x1xf32> -> vector<8x16x17xf32>
    %cst_2 = arith.constant 0.000000e+00 : f32
    %3 = vector.broadcast %cst_2 : f32 to vector<8x1x17xf32>
    %4 = tpu.concatenate %2, %3 in 1 : vector<8x16x17xf32>, vector<8x1x17xf32> -> vector<8x17x17xf32>
    %c0_3 = arith.constant 0 : index
    %c0_4 = arith.constant 0 : index
    %c0_5 = arith.constant 0 : index
    %5 = vector.load %arg2[%c0_3, %c0_4, %c0_5] : memref<8x17x17xf32, #tpu.memory_space<vmem>>, vector<8x17x17xf32>
    tpu.vector_store %arg2[%c0_3, %c0_4, %c0_5], %4 {strides = array<i32>} : memref<8x17x17xf32, #tpu.memory_space<vmem>>, vector<8x17x17xf32>,
    return
  }
  func.func @transform_0(%arg0: i32) -> (i32, i32, i32) {
    %c0_i32 = arith.constant 0 : i32
    %c0_i32_0 = arith.constant 0 : i32
    %c0_i32_1 = arith.constant 0 : i32
    return %arg0, %c0_i32, %c0_i32_0 : i32, i32, i32
  }
  func.func @transform_1(%arg0: i32) -> (i32, i32, i32) {
    %c0_i32 = arith.constant 0 : i32
    %c0_i32_0 = arith.constant 0 : i32
    %c0_i32_1 = arith.constant 0 : i32
    return %arg0, %c0_i32, %c0_i32_0 : i32, i32, i32
  }
}

</mosaic_0001>

<llo_original>
// kernel: tpu_custom_call.1
$region0: #{tpu_custom_call.1}
  #allocation0 [shape = 'u32[]', space=smem, size = 0x4, offset = 0x4, fixed_abs, tag = 'smem constant byte address 0x4 - core index']
  #allocation1 [shape = 'u32[144,128]{1,0:T(1,128)}', space=vmem, size = 0x12000, scoped, tag = 'internal scratch']
  %s0 = inlined_call_operand.hbm [shape: f32[8,16,16], index: 0, kind: input, shape index: {}]
  %s1 = inlined_call_operand.vmem [shape: f32[8,17,17], index: 1, kind: output, shape index: {}]
  %s2 = sld [smem:[#allocation0]]
  $region18: #{tpu_custom_call.1} parent=0
    _
  %s4 = ssub.s32 1, %s2
  %s5 = scalar_select 0, %s4, %s2
  $region1: #{tpu_custom_call.1} parent=0
    #allocation2 [shape = 'u8[65536]{0}', space=vmem, size = 0x10000, scoped, tag = 'input window, operand 0, single buffered']
    #allocation3 [shape = 's32[1]{0}', space=sflag, size = 0x4, scoped, tag = 'scoped memory for tpu_custom_call.1']
    %6 = vsyncpa [#allocation3], 0
    // Predicated region
    $region2: #{tpu_custom_call.1} parent=1 // pred_check
      _
    $region3: #{tpu_custom_call.1} parent=1 // pred_check_branch
      %8 = sbr.rel (0) target = $region5
    $region4: #{tpu_custom_call.1} parent=1 // pred_region
      %s10 = ssub.s32 2048, 2048
      %11 = vsyncadd [#allocation3], %s10
      %s12 = sshll.u32 [#allocation2], 4
      %s13 = int_to_ptr.vmem [resolvable:$true] %s12
      %18 = dma.hbm_to_vmem [thread:$0]  %s0, 2048, %s13, [#allocation3], 128, 128, 8
    $region5: #{tpu_custom_call.1} parent=1 // pred_fallthru
      _
    // Predicated region
    $region6: #{tpu_custom_call.1} parent=1 // pred_check
      _
    $region7: #{tpu_custom_call.1} parent=1 // pred_check_branch
      %20 = sbr.rel (0) target = $region9
    $region8: #{tpu_custom_call.1} parent=1 // pred_region
      %21 = dma.done [#allocation3], 2048
    $region9: #{tpu_custom_call.1} parent=1 // pred_fallthru
      _
    %v22 = vld [vmem:[#allocation2] sm:$0xff]
    %v23 = vld [vmem:[#allocation2 + $0x8] sm:$0xff]
    %v24 = vld [vmem:[#allocation2 + $0x10] sm:$0xff]
    %v25 = vld [vmem:[#allocation2 + $0x18] sm:$0xff]
    %v26 = vld [vmem:[#allocation2 + $0x20] sm:$0xff]
    %v27 = vld [vmem:[#allocation2 + $0x28] sm:$0xff]
    %v28 = vld [vmem:[#allocation2 + $0x30] sm:$0xff]
    %v29 = vld [vmem:[#allocation2 + $0x38] sm:$0xff]
    %v30 = vld [vmem:[#allocation2 + $0x40] sm:$0xff]
    %v31 = vld [vmem:[#allocation2 + $0x48] sm:$0xff]
    %v32 = vld [vmem:[#allocation2 + $0x50] sm:$0xff]
    %v33 = vld [vmem:[#allocation2 + $0x58] sm:$0xff]
    %v34 = vld [vmem:[#allocation2 + $0x60] sm:$0xff]
    %v35 = vld [vmem:[#allocation2 + $0x68] sm:$0xff]
    %v36 = vld [vmem:[#allocation2 + $0x70] sm:$0xff]
    %v37 = vld [vmem:[#allocation2 + $0x78] sm:$0xff]
    %vm38 = vcmask 130048
    %v39 = vsel %vm38, %v22, 0.0
    %v40 = vsel %vm38, %v23, 0.0
    %v41 = vsel %vm38, %v24, 0.0
    %v42 = vsel %vm38, %v25, 0.0
    %v43 = vsel %vm38, %v26, 0.0
    %v44 = vsel %vm38, %v27, 0.0
    %v45 = vsel %vm38, %v28, 0.0
    %v46 = vsel %vm38, %v29, 0.0
    %v47 = vsel %vm38, %v30, 0.0
    %v48 = vsel %vm38, %v31, 0.0
    %v49 = vsel %vm38, %v32, 0.0
    %v50 = vsel %vm38, %v33, 0.0
    %v51 = vsel %vm38, %v34, 0.0
    %v52 = vsel %vm38, %v35, 0.0
    %v53 = vsel %vm38, %v36, 0.0
    %v54 = vsel %vm38, %v37, 0.0
    %vm55 = vcmask 138240
    %56 = vst.msk [vmem:[%s1] sm:$0xff] %vm55, %v39
    %57 = vst.msk [vmem:[%s1 + $0x8] sm:$0xff] %vm55, %v40
    %vm58 = vcmask 131072
    %59 = vst.msk [vmem:[%s1 + $0x10] sm:$0x1] %vm58, 0.0
    %60 = vst.msk [vmem:[%s1 + $0x18] sm:$0xff] %vm55, %v41
    %61 = vst.msk [vmem:[%s1 + $0x20] sm:$0xff] %vm55, %v42
    %62 = vst.msk [vmem:[%s1 + $0x28] sm:$0x1] %vm58, 0.0
    %63 = vst.msk [vmem:[%s1 + $0x30] sm:$0xff] %vm55, %v43
    %64 = vst.msk [vmem:[%s1 + $0x38] sm:$0xff] %vm55, %v44
    %65 = vst.msk [vmem:[%s1 + $0x40] sm:$0x1] %vm58, 0.0
    %66 = vst.msk [vmem:[%s1 + $0x48] sm:$0xff] %vm55, %v45
    %67 = vst.msk [vmem:[%s1 + $0x50] sm:$0xff] %vm55, %v46
    %68 = vst.msk [vmem:[%s1 + $0x58] sm:$0x1] %vm58, 0.0
    %69 = vst.msk [vmem:[%s1 + $0x60] sm:$0xff] %vm55, %v47
    %70 = vst.msk [vmem:[%s1 + $0x68] sm:$0xff] %vm55, %v48
    %71 = vst.msk [vmem:[%s1 + $0x70] sm:$0x1] %vm58, 0.0
    %72 = vst.msk [vmem:[%s1 + $0x78] sm:$0xff] %vm55, %v49
    %73 = vst.msk [vmem:[%s1 + $0x80] sm:$0xff] %vm55, %v50
    %74 = vst.msk [vmem:[%s1 + $0x88] sm:$0x1] %vm58, 0.0
    %75 = vst.msk [vmem:[%s1 + $0x90] sm:$0xff] %vm55, %v51
    %76 = vst.msk [vmem:[%s1 + $0x98] sm:$0xff] %vm55, %v52
    %77 = vst.msk [vmem:[%s1 + $0xa0] sm:$0x1] %vm58, 0.0
    %78 = vst.msk [vmem:[%s1 + $0xa8] sm:$0xff] %vm55, %v53
    %79 = vst.msk [vmem:[%s1 + $0xb0] sm:$0xff] %vm55, %v54
    %80 = vst.msk [vmem:[%s1 + $0xb8] sm:$0x1] %vm58, 0.0
    // Predicated region
    $region10: #{tpu_custom_call.1} parent=1 // pred_check
      _
    $region11: #{tpu_custom_call.1} parent=1 // pred_check_branch
      %82 = sbr.rel (0) target = $region13
    $region12: #{tpu_custom_call.1} parent=1 // pred_region
      _
    $region13: #{tpu_custom_call.1} parent=1 // pred_fallthru
      _
    // Predicated region
    $region14: #{tpu_custom_call.1} parent=1 // pred_check
      _
    $region15: #{tpu_custom_call.1} parent=1 // pred_check_branch
      %84 = sbr.rel (0) target = $region17
    $region16: #{tpu_custom_call.1} parent=1 // pred_region
      _
    $region17: #{tpu_custom_call.1} parent=1 // pred_fallthru
      _
    %85 = vsyncpa [#allocation3], 1

</llo_original>
